<compile_context>
chip_gen: v7x
topology: tpu7x:2x2x1
jax: 0.10.0
libtpu: 0.0.40
codegen_flags: <defaults>
</compile_context>

<pallas_src>
import jax
import jax.numpy as jnp
from jax.experimental import pallas as pl
from jax.experimental.pallas import tpu as pltpu

KERNEL_SIZE = 3
PADDING = 1
LANE = 128


def _round_up(n, m):
    return ((n + m - 1) // m) * m


def _dsconv_kernel(x_ref, halo_ref, w_ref, b_ref, o_ref, xcat_ref):
    """One (TB batch elems) x (TL length columns) tile per grid step.

    x_ref    : (TB, C, TL)    input tile, channels on sublanes, length on lanes
    halo_ref : (TB, 1, C, 2)  [:, :, :, 0] = last column of the left neighbour tile
                              [:, :, :, 1] = first column of the right neighbour tile
                              (zeros at the sequence ends -> fused "same" padding)
    w_ref    : (C, 3C)        folded weights W_cat[o, k*C + c] = w_pw[o,c] * w_dw[c,k]
    b_ref    : (C, 1)         folded bias b' = w_pw @ b_dw + b_pw  (f32)
    o_ref    : (TB, C, TL)    output tile
    xcat_ref : (3C, TL)       VMEM scratch holding [x_{l-1}; x_l; x_{l+1}]
    """
    tb, c, tl = x_ref.shape
    cdt = xcat_ref.dtype

    # Hoisted once per grid step; w_ref is VMEM-resident (constant index_map).
    w_cat = w_ref[...]          # (C, 3C), compute dtype (bf16)
    bias = b_ref[...]           # (C, 1), f32, lane-broadcasts onto the accumulator

    def body(i, carry):
        x = x_ref[i].astype(cdt)              # (C, TL)
        h = halo_ref[i].astype(cdt)           # (1, C, 2)
        left = h[0, :, 0:1]                   # (C, 1)
        right = h[0, :, 1:2]                  # (C, 1)

        # Shifted tiles with the halo column spliced in at the tile edge.
        xcat_ref[0:c, :] = jnp.concatenate([left, x[:, : tl - 1]], axis=1)
        xcat_ref[c:2 * c, :] = x
        xcat_ref[2 * c:3 * c, :] = jnp.concatenate([x[:, 1:], right], axis=1)

        # Single fused MXU contraction of depth 3C (bf16 in, f32 accumulate).
        acc = jnp.dot(w_cat, xcat_ref[...], preferred_element_type=jnp.float32)
        o_ref[i] = (acc + bias).astype(o_ref.dtype)
        return carry

    jax.lax.fori_loop(0, tb, body, 0, unroll=True)


def depthwise_separable_conv1d(x, w_dw, b_dw, w_pw, b_pw, *,
                               compute_dtype=jnp.bfloat16, max_tile_len=1024):
    """x: (B, C, L) float32 in torch nn.Conv1d layout.

    w_dw: (C, 1, K) depthwise weight (groups=C), b_dw: (C,)
    w_pw: (C, C, 1) pointwise weight (out, in, 1), b_pw: (C,)
    Returns (B, C, L), matching the PyTorch module output.
    """
    B, C, L = x.shape
    K = w_dw.shape[-1]
    assert K == KERNEL_SIZE and PADDING == 1, "kernel specialized for kernel_size=3, padding=1"
    dtype = x.dtype
    cbytes = jnp.dtype(compute_dtype).itemsize
    xbytes = jnp.dtype(dtype).itemsize
    MAX_TL = max(LANE, min(int(max_tile_len), 1024))

    # ---- hardware VMEM budget (per-generation: ~45 MiB v7x, ~90 MiB v5e/v6e) ----
    try:
        vmem_cap = int(pltpu.get_tpu_info().vmem_capacity_bytes)
        if vmem_cap < 32 * (1 << 20):
            vmem_cap = 64 * (1 << 20)
    except Exception:
        vmem_cap = 64 * (1 << 20)          # assume the smallest (v7x per-TC) if query fails
    vmem_budget = int(vmem_cap * 0.70)     # honest headroom for compiler scratch

    def fits(tl, tb):
        w_blk = 2 * (C * max(3 * C, LANE) * cbytes + C * LANE * 4)   # W_cat + padded bias
        scratch = 3 * C * tl * cbytes                                # xcat scratch
        temps = 3 * C * tl * cbytes + C * tl * 4                     # in-flight values + f32 acc
        xo_blk = 2 * 2 * tb * C * tl * xbytes                        # double-buffered in/out tiles
        halo_blk = 2 * tb * C * LANE * xbytes                        # lane-padded halo blocks
        return w_blk + scratch + temps + xo_blk + halo_blk <= vmem_budget

    # ---- tile length: prefer a single full-length tile (no pad), else the lane-dense
    #      multiple of 128 that minimizes padding and fits the budget -----------------
    if L <= MAX_TL and fits(L, 1):
        TL, Lp, nT = L, L, 1
    else:
        best = None
        for t in (1024, 512, 256, 128):
            if t > MAX_TL or not fits(t, 1):
                continue
            lp = _round_up(L, t)
            key = (lp - L, -t)                      # minimize pad, then prefer longer TL
            if best is None or key < best[0]:
                best = (key, t, lp)
        if best is None:
            # TODO(synk): add an output-channel grid axis for very large C where even a
            # 128-wide tile plus the resident folded weights exceeds the VMEM budget.
            best = (None, 128, _round_up(L, 128))
        _, TL, Lp = best
        nT = Lp // TL

    # ---- batch block: largest divisor of B that fits the budget (capped) -----------
    cap = 1
    for cand in range(1, min(B, 16) + 1):
        if fits(TL, cand):
            cap = cand
        else:
            break
    TB = 1
    for cand in range(cap, 0, -1):
        if B % cand == 0:
            TB = cand
            break

    # v7x has 2 TensorCores: guarantee >=2 grid steps when the shape allows it.
    if (B // TB) * nT < 2:
        if TB > 1:
            for cand in range(TB - 1, 0, -1):
                if B % cand == 0 and (B // cand) * nT >= 2:
                    TB = cand
                    break
        elif nT == 1 and L > LANE:
            TL = LANE * max(1, pl.cdiv(L, LANE) // 2)
            Lp = _round_up(L, TL)
            nT = Lp // TL

    # ---- fold depthwise into pointwise; single (C, 3C) contraction weight ----------
    wdw2 = w_dw[:, 0, :].astype(jnp.float32)                 # (C, K)
    wpw2 = w_pw[:, :, 0].astype(jnp.float32)                 # (C_out, C_in)
    # column blocks ordered [k=0 | k=1 | k=2] to match scratch rows [x_{l-1}; x_l; x_{l+1}]
    w_cat = jnp.concatenate([wpw2 * wdw2[None, :, k] for k in range(K)], axis=1)
    w_cat = w_cat.astype(compute_dtype)                      # (C, 3C)
    b_fold = (wpw2 @ b_dw.astype(jnp.float32)
              + b_pw.astype(jnp.float32)).reshape(C, 1)      # (C, 1) f32

    # ---- minimal right pad only when L is not a multiple of TL ---------------------
    x_p = x if Lp == L else jnp.pad(x, ((0, 0), (0, 0), (0, Lp - L)))

    # ---- packed halo columns: one (B, nT, C, 2) side array, one DMA per step -------
    if nT > 1:
        x_r = x_p.reshape(B, C, nT, TL)
        zcol = jnp.zeros((B, C, 1), dtype)
        lefts = jnp.concatenate([zcol, x_r[:, :, :-1, TL - 1]], axis=-1)   # (B, C, nT)
        rights = jnp.concatenate([x_r[:, :, 1:, 0], zcol], axis=-1)        # (B, C, nT)
        halo = jnp.transpose(jnp.stack([lefts, rights], axis=-1), (0, 2, 1, 3))  # (B, nT, C, 2)
    else:
        halo = jnp.zeros((B, 1, C, 2), dtype)

    grid = (B // TB, nT)
    cost = pl.CostEstimate(
        flops=2 * B * Lp * C * 3 * C,
        transcendentals=0,
        bytes_accessed=int(2 * B * Lp * C * xbytes            # x read + out write
                           + B * nT * C * 2 * xbytes          # halo columns
                           + C * 3 * C * cbytes + C * 4),     # weights + bias
    )

    out_p = pl.pallas_call(
        _dsconv_kernel,
        out_shape=jax.ShapeDtypeStruct((B, C, Lp), dtype),
        grid_spec=pltpu.PrefetchScalarGridSpec(
            num_scalar_prefetch=0,
            grid=grid,
            in_specs=[
                pl.BlockSpec((TB, C, TL), lambda b, t: (b, 0, t)),
                pl.BlockSpec((TB, 1, C, 2), lambda b, t: (b, t, 0, 0)),
                pl.BlockSpec((C, 3 * C), lambda b, t: (0, 0)),
                pl.BlockSpec((C, 1), lambda b, t: (0, 0)),
            ],
            out_specs=pl.BlockSpec((TB, C, TL), lambda b, t: (b, 0, t)),
            scratch_shapes=[pltpu.VMEM((3 * C, TL), compute_dtype)],
        ),
        compiler_params=pltpu.CompilerParams(
            dimension_semantics=("parallel", "parallel"),
            vmem_limit_bytes=int(vmem_budget),
        ),
        cost_estimate=cost,
    )(x_p, halo, w_cat, b_fold)

    return out_p if Lp == L else out_p[:, :, :L]


def _reference(x, w_dw, b_dw, w_pw, b_pw):
    """Pure-JAX reference of the PyTorch forward (for verification)."""
    B, C, L = x.shape
    xp = jnp.pad(x, ((0, 0), (0, 0), (PADDING, PADDING)))
    dw = jnp.zeros((B, C, L), jnp.float32)
    for k in range(KERNEL_SIZE):
        dw = dw + xp[:, :, k:k + L] * w_dw[:, 0, k][None, :, None]
    dw = dw + b_dw[None, :, None]
    return jnp.einsum('oc,bcl->bol', w_pw[:, :, 0], dw) + b_pw[None, :, None]


if __name__ == "__main__":
    def make_inputs(key, B, C, L):
        k_x, k_wdw, k_bdw, k_wpw, k_bpw = jax.random.split(key, 5)
        x = jax.random.normal(k_x, (B, C, L), dtype=jnp.float32)
        w_dw = jax.random.normal(k_wdw, (C, 1, KERNEL_SIZE), dtype=jnp.float32) * 0.3
        b_dw = jax.random.normal(k_bdw, (C,), dtype=jnp.float32) * 0.1
        w_pw = jax.random.normal(k_wpw, (C, C, 1), dtype=jnp.float32) * 0.3
        b_pw = jax.random.normal(k_bpw, (C,), dtype=jnp.float32) * 0.1
        return x, w_dw, b_dw, w_pw, b_pw

    key = jax.random.PRNGKey(0)
    k1, k2 = jax.random.split(key)

    # Case 1: the module-implied small shape; single-tile path (TL == L, no pad).
    # Tolerance is loosened vs. the f32 version because the MXU inputs are bf16.
    x, w_dw, b_dw, w_pw, b_pw = make_inputs(k1, 2, 8, 16)
    out = jax.block_until_ready(depthwise_separable_conv1d(x, w_dw, b_dw, w_pw, b_pw))
    ref = _reference(x, w_dw, b_dw, w_pw, b_pw)
    assert out.shape == ref.shape
    assert jnp.allclose(out, ref, atol=3e-2, rtol=3e-2), "mismatch vs reference (case 1)"

    # Case 2: multi-tile path with halo columns, ragged tail (pad) and a batch block.
    x, w_dw, b_dw, w_pw, b_pw = make_inputs(k2, 3, 16, 320)
    out = jax.block_until_ready(
        depthwise_separable_conv1d(x, w_dw, b_dw, w_pw, b_pw, max_tile_len=128))
    ref = _reference(x, w_dw, b_dw, w_pw, b_pw)
    assert out.shape == ref.shape
    assert jnp.allclose(out, ref, atol=3e-2, rtol=3e-2), "mismatch vs reference (case 2)"

    print("KERNEL_OK")
</pallas_src>

<mosaic_0001>
module attributes {stable_mosaic.version = 11 : i64} {
  func.func @_dsconv_kernel(%arg0: i32, %arg1: i32, %arg2: memref<1x8x16xf32, #tpu.memory_space<vmem>>, %arg3: memref<1x1x8x2xf32, #tpu.memory_space<vmem>>, %arg4: memref<8x24xbf16, #tpu.memory_space<vmem>>, %arg5: memref<8x1xf32, #tpu.memory_space<vmem>>, %arg6: memref<1x8x16xf32, #tpu.memory_space<vmem>>, %arg7: memref<24x16xbf16, #tpu.memory_space<vmem>>) attributes {dimension_semantics = [#tpu.dimension_semantics<parallel>, #tpu.dimension_semantics<parallel>], iteration_bounds = array<i64: 2, 1>, scalar_prefetch = 0 : i64, scratch_operands = 1 : i64, tpu.core_type = #tpu.core_type<tc>, window_params = [{transform_indices = @transform_0, window_bounds = array<i64: 1, 8, 16>}, {transform_indices = @transform_1, window_bounds = array<i64: 1, 1, 8, 2>}, {pipeline_mode = #tpu.pipeline_mode<synchronous>, transform_indices = @transform_2, window_bounds = array<i64: 8, 24>}, {pipeline_mode = #tpu.pipeline_mode<synchronous>, transform_indices = @transform_3, window_bounds = array<i64: 8, 1>}, {transform_indices = @transform_4, window_bounds = array<i64: 1, 8, 16>}]} {
    %c0 = arith.constant 0 : index
    %c0_0 = arith.constant 0 : index
    %0 = vector.load %arg4[%c0, %c0_0] : memref<8x24xbf16, #tpu.memory_space<vmem>>, vector<8x24xbf16>
    %c0_1 = arith.constant 0 : index
    %c0_2 = arith.constant 0 : index
    %1 = vector.load %arg5[%c0_1, %c0_2] : memref<8x1xf32, #tpu.memory_space<vmem>>, vector<8x1xf32>
    %c0_i32 = arith.constant 0 : i32
    %2 = arith.index_cast %c0_i32 : i32 to index
    %c0_3 = arith.constant 0 : index
    %c0_4 = arith.constant 0 : index
    %3 = vector.load %arg2[%2, %c0_3, %c0_4] : memref<1x8x16xf32, #tpu.memory_space<vmem>>, vector<1x8x16xf32>
    %4 = vector.shape_cast %3 : vector<1x8x16xf32> to vector<8x16xf32>
    %5 = arith.truncf %4 : vector<8x16xf32> to vector<8x16xbf16>
    %6 = arith.index_cast %c0_i32 : i32 to index
    %c0_5 = arith.constant 0 : index
    %c0_6 = arith.constant 0 : index
    %c0_7 = arith.constant 0 : index
    %7 = vector.load %arg3[%6, %c0_5, %c0_6, %c0_7] : memref<1x1x8x2xf32, #tpu.memory_space<vmem>>, vector<1x1x8x2xf32>
    %8 = vector.shape_cast %7 : vector<1x1x8x2xf32> to vector<1x8x2xf32>
    %9 = arith.truncf %8 : vector<1x8x2xf32> to vector<1x8x2xbf16>
    %10 = vector.extract_strided_slice %9 {offsets = [0, 0, 0], sizes = [1, 8, 1], strides = [1, 1, 1]} : vector<1x8x2xbf16> to vector<1x8x1xbf16>
    %11 = vector.shape_cast %10 : vector<1x8x1xbf16> to vector<8x1xbf16>
    %12 = vector.extract_strided_slice %9 {offsets = [0, 0, 1], sizes = [1, 8, 1], strides = [1, 1, 1]} : vector<1x8x2xbf16> to vector<1x8x1xbf16>
    %13 = vector.shape_cast %12 : vector<1x8x1xbf16> to vector<8x1xbf16>
    %14 = vector.extract_strided_slice %5 {offsets = [0, 0], sizes = [8, 15], strides = [1, 1]} : vector<8x16xbf16> to vector<8x15xbf16>
    %15 = tpu.concatenate %11, %14 in 1 : vector<8x1xbf16>, vector<8x15xbf16> -> vector<8x16xbf16>
    %c0_8 = arith.constant 0 : index
    %c0_9 = arith.constant 0 : index
    %16 = vector.load %arg7[%c0_8, %c0_9] : memref<24x16xbf16, #tpu.memory_space<vmem>>, vector<8x16xbf16>
    tpu.vector_store %arg7[%c0_8, %c0_9], %15 {strides = array<i32>} : memref<24x16xbf16, #tpu.memory_space<vmem>>, vector<8x16xbf16>,
    %c8 = arith.constant 8 : index
    %c0_10 = arith.constant 0 : index
    %17 = vector.load %arg7[%c8, %c0_10] : memref<24x16xbf16, #tpu.memory_space<vmem>>, vector<8x16xbf16>
    tpu.vector_store %arg7[%c8, %c0_10], %5 {strides = array<i32>} : memref<24x16xbf16, #tpu.memory_space<vmem>>, vector<8x16xbf16>,
    %18 = vector.extract_strided_slice %5 {offsets = [0, 1], sizes = [8, 15], strides = [1, 1]} : vector<8x16xbf16> to vector<8x15xbf16>
    %19 = tpu.concatenate %18, %13 in 1 : vector<8x15xbf16>, vector<8x1xbf16> -> vector<8x16xbf16>
    %c16 = arith.constant 16 : index
    %c0_11 = arith.constant 0 : index
    %20 = vector.load %arg7[%c16, %c0_11] : memref<24x16xbf16, #tpu.memory_space<vmem>>, vector<8x16xbf16>
    tpu.vector_store %arg7[%c16, %c0_11], %19 {strides = array<i32>} : memref<24x16xbf16, #tpu.memory_space<vmem>>, vector<8x16xbf16>,
    %c0_12 = arith.constant 0 : index
    %c0_13 = arith.constant 0 : index
    %21 = vector.load %arg7[%c0_12, %c0_13] : memref<24x16xbf16, #tpu.memory_space<vmem>>, vector<24x16xbf16>
    %cst = arith.constant dense<0.000000e+00> : vector<8x16xf32>
    %22 = tpu.matmul %0, %21, %cst {dimension_numbers = #tpu.dot_dimension_numbers<[1], [0], [0], [1], [0, 0, 1, 1], [], []>} : vector<8x24xbf16>, vector<24x16xbf16>, vector<8x16xf32> -> vector<8x16xf32>
    %23 = vector.broadcast %1 : vector<8x1xf32> to vector<8x16xf32>
    %24 = arith.addf %22, %23 : vector<8x16xf32>
    %25 = arith.index_cast %c0_i32 : i32 to index
    %c0_14 = arith.constant 0 : index
    %c0_15 = arith.constant 0 : index
    %26 = vector.load %arg6[%25, %c0_14, %c0_15] : memref<1x8x16xf32, #tpu.memory_space<vmem>>, vector<1x8x16xf32>
    %27 = vector.shape_cast %26 : vector<1x8x16xf32> to vector<8x16xf32>
    %28 = vector.shape_cast %24 : vector<8x16xf32> to vector<1x8x16xf32>
    tpu.vector_store %arg6[%25, %c0_14, %c0_15], %28 {strides = array<i32>} : memref<1x8x16xf32, #tpu.memory_space<vmem>>, vector<1x8x16xf32>,
    %c1_i32 = arith.constant 1 : i32
    return
  }
  func.func @transform_0(%arg0: i32, %arg1: i32) -> (i32, i32, i32) {
    %c0_i32 = arith.constant 0 : i32
    %c0_i32_0 = arith.constant 0 : i32
    return %arg0, %c0_i32, %arg1 : i32, i32, i32
  }
  func.func @transform_1(%arg0: i32, %arg1: i32) -> (i32, i32, i32, i32) {
    %c0_i32 = arith.constant 0 : i32
    %c0_i32_0 = arith.constant 0 : i32
    %c0_i32_1 = arith.constant 0 : i32
    return %arg0, %arg1, %c0_i32, %c0_i32_0 : i32, i32, i32, i32
  }
  func.func @transform_2(%arg0: i32, %arg1: i32) -> (i32, i32) {
    %c0_i32 = arith.constant 0 : i32
    %c0_i32_0 = arith.constant 0 : i32
    %c0_i32_1 = arith.constant 0 : i32
    return %c0_i32, %c0_i32_0 : i32, i32
  }
  func.func @transform_3(%arg0: i32, %arg1: i32) -> (i32, i32) {
    %c0_i32 = arith.constant 0 : i32
    %c0_i32_0 = arith.constant 0 : i32
    %c0_i32_1 = arith.constant 0 : i32
    return %c0_i32, %c0_i32_0 : i32, i32
  }
  func.func @transform_4(%arg0: i32, %arg1: i32) -> (i32, i32, i32) {
    %c0_i32 = arith.constant 0 : i32
    %c0_i32_0 = arith.constant 0 : i32
    return %arg0, %c0_i32, %arg1 : i32, i32, i32
  }
}

</mosaic_0001>

<llo_original>
// kernel: tpu_custom_call.1
$region0: #{tpu_custom_call.1}
  #allocation0 [shape = 'u32[]', space=smem, size = 0x4, offset = 0x4, fixed_abs, tag = 'smem constant byte address 0x4 - core index']
  #allocation1 [shape = 'u32[144,128]{1,0:T(1,128)}', space=vmem, size = 0x12000, scoped, tag = 'internal scratch']
  #allocation2 [shape = 'bf16[24,16]{1,0:T(8,128)(2,1)}', space=vmem, size = 0x1800, scoped, tag = 'scratch operand']
  %s0 = inlined_call_operand.vmem [shape: f32[2,8,16], index: 0, kind: input, shape index: {}]
  %s1 = inlined_call_operand.vmem [shape: f32[2,1,8,2], index: 1, kind: input, shape index: {}]
  %s2 = inlined_call_operand.vmem [shape: bf16[8,24], index: 2, kind: input, shape index: {}]
  %s3 = inlined_call_operand.vmem [shape: f32[8,1], index: 3, kind: input, shape index: {}]
  %s4 = inlined_call_operand.hbm [shape: f32[2,8,16], index: 4, kind: output, shape index: {}]
  %s5 = sld [smem:[#allocation0]]
  $region49: #{tpu_custom_call.1} parent=0
    _
  %s7 = ssub.s32 1, %s5
  %s8 = scalar_select 0, %s7, %s5
  $region1: #{tpu_custom_call.1} parent=0
    #allocation3 [shape = 'u8[8192]{0}', space=vmem, size = 0x2000, scoped, tag = 'output window, operand 0']
    #allocation4 [shape = 's32[2]{0}', space=sflag, size = 0x8, scoped, tag = 'scoped memory for tpu_custom_call.1']
    %9 = vsyncpa [#allocation4], 0
    %s10 = scalar_lea.sflag [#allocation4], 1
    %11 = vsyncpa %s10, 0
    loop: start=0, step=1, limit=4
    $region2: #{tpu_custom_call.1} parent=1 // loop_pre_header
      _
    $region3: #{tpu_custom_call.1} parent=1 // loop_header
      %s13 = sphi 0, %s17
      %p14 = scmp.ge.s32.totalorder %s13, 4
      %s20 = sphi 0, %s32
      %s21 = sphi 0, %s28
      %s22 = sphi 0, %s20
      %s23 = sphi 0, %s21
      %s24 = sphi 0, %s22
      %s25 = sphi 0, %s23
      %s37 = sphi 0, %s39
      %s40 = sphi 0, %s37
      %s41 = sphi 0, %s40
      %s57 = sphi 0, %s41
      %s65 = sphi 0, %s67
      %s68 = sphi 0, %s65
      %s69 = sphi 0, %s68
      %s85 = sphi 0, %s69
      %s89 = sphi 0, %s89
      %s91 = sphi 0, %s89
      %s92 = sphi 0, %s91
      %s106 = sphi 0, %s92
      %s110 = sphi 0, %s110
      %s112 = sphi 0, %s110
      %s113 = sphi 0, %s112
      %s127 = sphi 0, %s113
      %s135 = sphi 0, %s137
      %s138 = sphi 0, %s135
      %s139 = sphi 0, %s138
      %s155 = sphi 0, %s139
    $region4: #{tpu_custom_call.1} parent=1 // loop_header_branch
      %16 = sbr.rel (%p14) target = $region8
    $region5: #{tpu_custom_call.1} parent=1 // loop_body
      %s18 = ssub.s32 %s13, 1
      %s19 = ssub.s32 %s13, 2
      %s26 = sadd.s32 1, %s21
      %p27 = scmp.ge.s32.totalorder %s26, 1
      %s28 = scalar_select %p27, 0, %s26
      %s29 = sadd.s32 1, %s20
      %s30 = scalar_select %p27, %s29, %s20
      %p31 = scmp.ge.s32.totalorder %s30, 2
      %s32 = scalar_select %p31, 0, %s30
      %s33 = ssub.s32 %s20, %s32
      %s34 = ssub.s32 %s21, %s28
      %s35 = sor.u32 %s33, %s34
      %p36 = scmp.eq.s32.totalorder %s35, 0
      %s38 = sadd.s32 %s37, 1
      %s39 = scalar_select %p36, %s37, %s38
      %p42 = pneg %p36
      %p43 = scmp.eq.s32.totalorder %s13, 1
      %p44 = por %p42, %p43
      %p45 = scmp.ne.s32.totalorder %s37, %s40
      %p46 = scmp.eq.s32.totalorder %s13, 0
      %p47 = por %p45, %p46
      %p48 = scmp.ne.s32.totalorder %s37, %s40
      %p49 = scmp.eq.s32.totalorder %s18, 1
      %p50 = por %p48, %p49
      %p51 = scmp.ne.s32.totalorder %s40, %s41
      %p52 = scmp.eq.s32.totalorder %s18, 0
      %p53 = por %p51, %p52
      %p54 = scmp.ne.s32.totalorder %s40, %s41
      %p55 = scmp.eq.s32.totalorder %s19, 1
      %p56 = por %p54, %p55
      %p58 = scmp.ne.s32.totalorder %s41, %s57
      %p59 = scmp.eq.s32.totalorder %s19, 0
      %p60 = por %p58, %p59
      %s61 = ssub.s32 %s20, %s32
      %s62 = ssub.s32 %s21, %s28
      %s63 = sor.u32 %s61, %s62
      %p64 = scmp.eq.s32.totalorder %s63, 0
      %s66 = sadd.s32 %s65, 1
      %s67 = scalar_select %p64, %s65, %s66
      %p70 = pneg %p64
      %p71 = scmp.eq.s32.totalorder %s13, 1
      %p72 = por %p70, %p71
      %p73 = scmp.ne.s32.totalorder %s65, %s68
      %p74 = scmp.eq.s32.totalorder %s13, 0
      %p75 = por %p73, %p74
      %p76 = scmp.ne.s32.totalorder %s65, %s68
      %p77 = scmp.eq.s32.totalorder %s18, 1
      %p78 = por %p76, %p77
      %p79 = scmp.ne.s32.totalorder %s68, %s69
      %p80 = scmp.eq.s32.totalorder %s18, 0
      %p81 = por %p79, %p80
      %p82 = scmp.ne.s32.totalorder %s68, %s69
      %p83 = scmp.eq.s32.totalorder %s19, 1
      %p84 = por %p82, %p83
      %p86 = scmp.ne.s32.totalorder %s69, %s85
      %p87 = scmp.eq.s32.totalorder %s19, 0
      %p88 = por %p86, %p87
      %s90 = sadd.s32 %s89, 1
      %p93 = scmp.eq.s32.totalorder %s13, 1
      %p94 = scmp.ne.s32.totalorder %s89, %s91
      %p95 = scmp.eq.s32.totalorder %s13, 0
      %p96 = por %p94, %p95
      %p97 = scmp.ne.s32.totalorder %s89, %s91
      %p98 = scmp.eq.s32.totalorder %s18, 1
      %p99 = por %p97, %p98
      %p100 = scmp.ne.s32.totalorder %s91, %s92
      %p101 = scmp.eq.s32.totalorder %s18, 0
      %p102 = por %p100, %p101
      %p103 = scmp.ne.s32.totalorder %s91, %s92
      %p104 = scmp.eq.s32.totalorder %s19, 1
      %p105 = por %p103, %p104
      %p107 = scmp.ne.s32.totalorder %s92, %s106
      %p108 = scmp.eq.s32.totalorder %s19, 0
      %p109 = por %p107, %p108
      %s111 = sadd.s32 %s110, 1
      %p114 = scmp.eq.s32.totalorder %s13, 1
      %p115 = scmp.ne.s32.totalorder %s110, %s112
      %p116 = scmp.eq.s32.totalorder %s13, 0
      %p117 = por %p115, %p116
      %p118 = scmp.ne.s32.totalorder %s110, %s112
      %p119 = scmp.eq.s32.totalorder %s18, 1
      %p120 = por %p118, %p119
      %p121 = scmp.ne.s32.totalorder %s112, %s113
      %p122 = scmp.eq.s32.totalorder %s18, 0
      %p123 = por %p121, %p122
      %p124 = scmp.ne.s32.totalorder %s112, %s113
      %p125 = scmp.eq.s32.totalorder %s19, 1
      %p126 = por %p124, %p125
      %p128 = scmp.ne.s32.totalorder %s113, %s127
      %p129 = scmp.eq.s32.totalorder %s19, 0
      %p130 = por %p128, %p129
      %s131 = ssub.s32 %s20, %s32
      %s132 = ssub.s32 %s21, %s28
      %s133 = sor.u32 %s131, %s132
      %p134 = scmp.eq.s32.totalorder %s133, 0
      %s136 = sadd.s32 %s135, 1
      %s137 = scalar_select %p134, %s135, %s136
      %p140 = pneg %p134
      %p141 = scmp.eq.s32.totalorder %s13, 1
      %p142 = por %p140, %p141
      %p143 = scmp.ne.s32.totalorder %s135, %s138
      %p144 = scmp.eq.s32.totalorder %s13, 0
      %p145 = por %p143, %p144
      %p146 = scmp.ne.s32.totalorder %s135, %s138
      %p147 = scmp.eq.s32.totalorder %s18, 1
      %p148 = por %p146, %p147
      %p149 = scmp.ne.s32.totalorder %s138, %s139
      %p150 = scmp.eq.s32.totalorder %s18, 0
      %p151 = por %p149, %p150
      %p152 = scmp.ne.s32.totalorder %s138, %s139
      %p153 = scmp.eq.s32.totalorder %s19, 1
      %p154 = por %p152, %p153
      %p156 = scmp.ne.s32.totalorder %s139, %s155
      %p157 = scmp.eq.s32.totalorder %s19, 0
      %p158 = por %p156, %p157
      %p159 = scmp.le.s32.totalorder 1, %s13
      %p160 = scmp.lt.s32.totalorder %s13, 3
      %p161 = pnand %p159, %p160
      %p162 = pneg %p161
      // Predicated region
      $region9: #{tpu_custom_call.1} parent=5 // pred_check
        _
      $region10: #{tpu_custom_call.1} parent=5 // pred_check_branch
        %164 = sbr.rel (%p161) target = $region12
      $region11: #{tpu_custom_call.1} parent=5 // pred_region
        %s165 = ssub.s32 %s13, 1
        // Predicated region
        $region13: #{tpu_custom_call.1} parent=11 // pred_check
          %p166 = pneg %p102
        $region14: #{tpu_custom_call.1} parent=11 // pred_check_branch
          %168 = sbr.rel (%p166) target = $region16
        $region15: #{tpu_custom_call.1} parent=11 // pred_region
          _
        $region16: #{tpu_custom_call.1} parent=11 // pred_fallthru
          _
        // Predicated region
        $region17: #{tpu_custom_call.1} parent=11 // pred_check
          %p169 = pneg %p123
        $region18: #{tpu_custom_call.1} parent=11 // pred_check_branch
          %171 = sbr.rel (%p169) target = $region20
        $region19: #{tpu_custom_call.1} parent=11 // pred_region
          _
        $region20: #{tpu_custom_call.1} parent=11 // pred_fallthru
          _
      $region12: #{tpu_custom_call.1} parent=5 // pred_fallthru
        _
      %p172 = scmp.lt.s32.totalorder %s13, 2
      // Predicated region
      $region21: #{tpu_custom_call.1} parent=5 // pred_check
        %p173 = pneg %p172
      $region22: #{tpu_custom_call.1} parent=5 // pred_check_branch
        %175 = sbr.rel (%p173) target = $region24
      $region23: #{tpu_custom_call.1} parent=5 // pred_region
        // Predicated region
        $region25: #{tpu_custom_call.1} parent=23 // pred_check
          %p176 = pneg %p47
        $region26: #{tpu_custom_call.1} parent=23 // pred_check_branch
          %178 = sbr.rel (%p176) target = $region28
        $region27: #{tpu_custom_call.1} parent=23 // pred_region
          %p179 = scmp.lt.s32.totalorder %s20, 1
          %s180 = scalar_select %p179, %s20, 1
          %p181 = scmp.lt.s32.totalorder %s21, 0
          %s182 = scalar_select %p181, %s21, 0
          %s183 = sadd.s32 %s182, %s180
          %s184 = smul.addr %s183, 8
          %s185 = scalar_lea.vmem %s0, %s184
        $region28: #{tpu_custom_call.1} parent=23 // pred_fallthru
          _
        // Predicated region
        $region29: #{tpu_custom_call.1} parent=23 // pred_check
          %p186 = pneg %p75
        $region30: #{tpu_custom_call.1} parent=23 // pred_check_branch
          %188 = sbr.rel (%p186) target = $region32
        $region31: #{tpu_custom_call.1} parent=23 // pred_region
          %p189 = scmp.lt.s32.totalorder %s20, 1
          %s190 = scalar_select %p189, %s20, 1
          %p191 = scmp.lt.s32.totalorder %s21, 0
          %s192 = scalar_select %p191, %s21, 0
          %s193 = sadd.s32 %s192, %s190
          %s194 = smul.addr %s193, 8
          %s195 = scalar_lea.vmem %s1, %s194
        $region32: #{tpu_custom_call.1} parent=23 // pred_fallthru
          _
      $region24: #{tpu_custom_call.1} parent=5 // pred_fallthru
        _
      %p196 = scmp.le.s32.totalorder 1, %s13
      %p197 = scmp.lt.s32.totalorder %s13, 3
      %p198 = pnand %p196, %p197
      %p199 = pneg %p198
      // Predicated region
      $region33: #{tpu_custom_call.1} parent=5 // pred_check
        _
      $region34: #{tpu_custom_call.1} parent=5 // pred_check_branch
        %201 = sbr.rel (%p198) target = $region36
      $region35: #{tpu_custom_call.1} parent=5 // pred_region
        %s202 = ssub.s32 %s13, 1
        %p203 = scmp.lt.s32.totalorder %s22, 1
        %s204 = scalar_select %p203, %s22, 1
        %p205 = scmp.lt.s32.totalorder %s23, 0
        %s206 = scalar_select %p205, %s23, 0
        %s207 = sadd.s32 %s206, %s204
        %s208 = smul.addr %s207, 8
        %s209 = scalar_lea.vmem %s0, %s208
        %p210 = pneg %p53
        %p211 = pneg %p50
        %p212 = scmp.lt.s32.totalorder %s22, 1
        %s213 = scalar_select %p212, %s22, 1
        %p214 = scmp.lt.s32.totalorder %s23, 0
        %s215 = scalar_select %p214, %s23, 0
        %s216 = sadd.s32 %s215, %s213
        %s217 = smul.addr %s216, 8
        %s218 = scalar_lea.vmem %s1, %s217
        %p219 = pneg %p81
        %p220 = pneg %p78
        %p221 = pneg %p102
        %p222 = pneg %p99
        %p223 = pneg %p123
        %p224 = pneg %p120
        %p225 = pneg %p151
        %p226 = pneg %p148
        %s227 = sand.u32 %s138, 1
        %s228 = scalar_lea.sflag [#allocation4], %s227
        %s229 = sand.u32 %s138, 1
        %s230 = smul.addr %s229, 8
        %s231 = scalar_lea.vmem [#allocation3], %s230
        %p232 = scmp.lt.s32.totalorder %s22, 1
        %s233 = scalar_select %p232, %s22, 1
        %p234 = scmp.lt.s32.totalorder %s23, 0
        %s235 = scalar_select %p234, %s23, 0
        %s236 = sadd.s32 %s235, %s233
        %s237 = smul.addr %s236, 8
        %s238 = scalar_lea.vmem %s0, %s237
        %p239 = scmp.lt.s32.totalorder %s22, 1
        %s240 = scalar_select %p239, %s22, 1
        %p241 = scmp.lt.s32.totalorder %s23, 0
        %s242 = scalar_select %p241, %s23, 0
        %s243 = sadd.s32 %s242, %s240
        %s244 = smul.addr %s243, 8
        %s245 = scalar_lea.vmem %s1, %s244
        %v247 = vld [vmem:[%s2] sm:$0xf]
        %v248 = vld [vmem:[%s3] sm:$0xff]
        %v249 = vld [vmem:[%s238] sm:$0xff]
        %v250 = vpack.c.bf16 %v249, %v249
        %v251 = vld [vmem:[%s245] sm:$0xff]
        %v252 = vpack.c.bf16 %v251, %v251
        %254 = vrot.lane.b32.xlu0 %v250, 1
        %v255 = vpop.permute.xlu0 %254
        %vm256 = vcmask 7168
        %v259 = vsel %vm256, %v252, %v255
        %vm261 = vcmask 125952
        %262 = vst.msk [vmem:[#allocation2] sm:$0xf] %vm261, %v259
        %263 = vst.msk [vmem:[#allocation2 + $0x4] sm:$0xf] %vm261, %v250
        %264 = vrot.lane.b32.xlu0 %v250, 127
        %v265 = vpop.permute.xlu0 %264
        %267 = vrot.lane.b32.xlu0 %v252, 14
        %v268 = vpop.permute.xlu0 %267
        %vm269 = vcmask 121856
        %v272 = vsel %vm269, %v265, %v268
        %274 = vst.msk [vmem:[#allocation2 + $0x8] sm:$0xf] %vm261, %v272
        %v275 = vld [vmem:[#allocation2] sm:$0xf]
        %v276 = vld [vmem:[#allocation2 + $0x4] sm:$0xf]
        %v277 = vld [vmem:[#allocation2 + $0x8] sm:$0xf]
        %279 = vset.pattern.permute.xlu0 0
        %280 = vperm.xlu0 %279, %v248
        %v281 = vpop.permute.xlu0 %280
        %v286 = vunpack.c.l.b16 %v275
        %v287 = vunpack.c.l.b16 %v276
        %v288 = vunpack.c.l.b16 %v277
        %v289 = vpack.c.b16 %v287, %v286
        %v290 = vpack.c.b16 %v288, %v288
        %vm292 = vcmask 195584
        %v294 = vsel %vm292, %v247, 0
        %vm296 = vcmask 1043456
        %v298 = vsel %vm296, %v290, 0
        %300 = vmatprep.subr.bf16.mxu0 0
        %301 = vmatpush1.bf16.msra.mxu0 %v289
        %302 = vmatprep.subr.bf16.mxu0 0
        %303 = vmatpush1.bf16.msra.mxu0 %v298
        %304 = vmatprep.subr.bf16.mxu0 0
        %305 = vmatpush1.bf16.msra.mxu0 0
        %306 = vmatprep.subr.bf16.mxu0 0
        %307 = vmatpush1.bf16.msra.mxu0 0
        %308 = vmatprep.subr.bf16.mxu0 0
        %309 = vmatpush1.bf16.msra.mxu0 0
        %310 = vmatprep.subr.bf16.mxu0 0
        %311 = vmatpush1.bf16.msra.mxu0 0
        %312 = vmatprep.subr.bf16.mxu0 0
        %313 = vmatpush1.bf16.msra.mxu0 0
        %314 = vmatprep.subr.bf16.mxu0 0
        %315 = vmatpush1.bf16.msra.mxu0 0
        %316 = vmatprep.subr.bf16.mxu0 0
        %317 = vmatpush1.bf16.msra.mxu0 0
        %318 = vmatprep.subr.bf16.mxu0 0
        %319 = vmatpush1.bf16.msra.mxu0 0
        %320 = vmatprep.subr.bf16.mxu0 0
        %321 = vmatpush1.bf16.msra.mxu0 0
        %322 = vmatprep.subr.bf16.mxu0 0
        %323 = vmatpush1.bf16.msra.mxu0 0
        %324 = vmatprep.subr.bf16.mxu0 0
        %325 = vmatpush1.bf16.msra.mxu0 0
        %326 = vmatprep.subr.bf16.mxu0 0
        %327 = vmatpush1.bf16.msra.mxu0 0
        %328 = vmatprep.subr.bf16.mxu0 0
        %329 = vmatpush1.bf16.msra.mxu0 0
        %330 = vmatprep.subr.bf16.mxu0 0
        %331 = vmatpush1.bf16.msra.mxu0 0
        %332 = vmatprep.mubr.bf16.mxu0 0
        %333 = vmatmul.mubr.bf16.gmra.mrb[0].mxu0 %v294
        %v334 = vpop.f32.mrb[0].mxu0
        %v335 = vadd.f32 %v281, %v334
        %v336 = vpop.f32.mrb[0].mxu0
        %v337 = vpop.f32.mrb[0].mxu0
        %v338 = vpop.f32.mrb[0].mxu0
        %339 = vdwg.mxu0
        %vm340 = vcmask 130048
        %341 = vst.msk [vmem:[%s231] sm:$0xff] %vm340, %v335
        %s342 = sand.u32 %s138, 1
        %s343 = scalar_lea.sflag [#allocation4], %s342
        %s344 = sand.u32 %s138, 1
        %s345 = smul.addr %s344, 8
        %s346 = scalar_lea.vmem [#allocation3], %s345
        // Predicated region
        $region37: #{tpu_custom_call.1} parent=35 // pred_check
          %p347 = pneg %p148
        $region38: #{tpu_custom_call.1} parent=35 // pred_check_branch
          %349 = sbr.rel (%p347) target = $region40
        $region39: #{tpu_custom_call.1} parent=35 // pred_region
          %s351 = ssub.s32 128, 128
          %352 = vsyncadd %s343, %s351
          %s353 = sadd.s32 %s23, %s22
          %s354 = smul.addr %s353, 128
          %s355 = scalar_lea.hbm %s4, %s354
          %s357 = sshll.u32 %s346, 4
          %s358 = int_to_ptr.vmem [resolvable:$true] %s357
          %360 = dma.vmem_to_hbm [thread:$0]  %s358, 128, %s355, %s343
        $region40: #{tpu_custom_call.1} parent=35 // pred_fallthru
          _
      $region36: #{tpu_custom_call.1} parent=5 // pred_fallthru
        _
      %p361 = scmp.le.s32.totalorder 2, %s13
      // Predicated region
      $region41: #{tpu_custom_call.1} parent=5 // pred_check
        %p362 = pneg %p361
      $region42: #{tpu_custom_call.1} parent=5 // pred_check_branch
        %364 = sbr.rel (%p362) target = $region44
      $region43: #{tpu_custom_call.1} parent=5 // pred_region
        %s365 = ssub.s32 %s13, 2
        // Predicated region
        $region45: #{tpu_custom_call.1} parent=43 // pred_check
          %p366 = pneg %p154
        $region46: #{tpu_custom_call.1} parent=43 // pred_check_branch
          %368 = sbr.rel (%p366) target = $region48
        $region47: #{tpu_custom_call.1} parent=43 // pred_region
          %s369 = sand.u32 %s139, 1
          %s370 = scalar_lea.sflag [#allocation4], %s369
          %s371 = sand.u32 %s139, 1
          %s372 = smul.addr %s371, 8
          %s373 = scalar_lea.vmem [#allocation3], %s372
          %374 = dma.done %s370, 128
        $region48: #{tpu_custom_call.1} parent=43 // pred_fallthru
          _
      $region44: #{tpu_custom_call.1} parent=5 // pred_fallthru
        _
    $region6: #{tpu_custom_call.1} parent=1 // loop_footer
      %s17 = sadd.s32 1, %s13
    $region7: #{tpu_custom_call.1} parent=1 // loop_footer_branch
      %12 = sbr.rel target = $region3
    $region8: #{tpu_custom_call.1} parent=1 // loop_exit
      _
    %375 = vsyncpa [#allocation4], 1
    %s376 = scalar_lea.sflag [#allocation4], 1
    %377 = vsyncpa %s376, 1

</llo_original>
